<compile_context>
chip_gen: v5e
topology: v5e:2x2
jax: 0.10.0
libtpu: 0.0.40
codegen_flags: <defaults>
</compile_context>

<pallas_src>
import functools

import jax
import jax.numpy as jnp
import numpy as np
from jax.experimental import pallas as pl
from jax.experimental.pallas import tpu as pltpu


def odefunc_kernel(x_ref, mask_ref, w1_ref, tb1_ref, w2_ref, tb2_ref, out_ref,
                   stk_ref, *, W):
    """One grid step == Nimg fused images; data operands are (Cp, Nimg*H*W)."""
    Cp, N = x_ref.shape

    def conv3x3(xin, w_ref, tbias):
        # Build the im2col operand (9*Cp, N) in VMEM scratch: tap k holds the
        # input shifted by (dy, dx) = (k//3-1, k%3-1); out-of-image sources
        # (including lane wrap across image boundaries) are zeroed by the
        # precomputed border masks.
        for k in range(9):
            dy, dx = k // 3 - 1, k % 3 - 1
            s = dy * W + dx                        # flattened spatial shift
            if s == 0:
                stk_ref[pl.ds(k * Cp, Cp), :] = xin          # center mask == 1
            else:
                # shifted[:, p] = xin[:, (p + s) % N] (XLU lane rotation)
                shifted = pltpu.roll(xin, (-s) % N, axis=1)
                stk_ref[pl.ds(k * Cp, Cp), :] = (
                    shifted * mask_ref[pl.ds(k * Cp, Cp), :])
        # Single K = 9*Cp matmul per conv; t-channel + bias folded into tbias.
        return tbias + jnp.dot(w_ref[...], stk_ref[...],
                               preferred_element_type=jnp.float32)

    x = jnp.maximum(x_ref[...], 0.0)               # relu(x)
    h = conv3x3(x, w1_ref, tb1_ref[...])           # ConcatConv2d #1
    h = jnp.maximum(h, 0.0)                        # relu
    y = conv3x3(h, w2_ref, tb2_ref[...])           # ConcatConv2d #2
    out_ref[...] = y.astype(out_ref.dtype)


def _t_vec(t, B):
    t = jnp.asarray(t, jnp.float32)
    if t.ndim == 0:
        return jnp.full((B,), t, jnp.float32)      # t = ones(B) * t (module)
    return jnp.broadcast_to(jnp.reshape(t, (-1,)), (B,)).astype(jnp.float32)


def make_conv_odefunc(params, x_shape):
    """Precompute per-parameter statics and return a jitted (t, x) -> out."""
    w1, b1, w2, b2 = params            # HWIO weights (3,3,Cin+1,Cout); (Cout,)
    B, C, H, W = x_shape
    Ch = w1.shape[-1]
    HW = H * W
    Cp = -(-max(C, Ch) // 8) * 8       # pad channels to the 8-sublane width

    # ---- images-per-block (lane fusion): target ~512 lanes per grid step ----
    nimg = max(1, min(B, max(1, 512 // HW)))
    if (nimg * HW) % 128 != 0:         # (8,128) rule: fall back to full width
        nimg = B
    B_pad = -(-B // nimg) * nimg
    nsteps = B_pad // nimg
    Nblk = nimg * HW

    # ---- host-side static precompute (runs once per parameter set) ----------
    # Border-validity masks for the 9 taps, per in-image position.
    yy, xx = np.meshgrid(np.arange(H), np.arange(W), indexing="ij")
    masks_np = np.stack([
        ((yy + k // 3 - 1 >= 0) & (yy + k // 3 - 1 < H) &
         (xx + k % 3 - 1 >= 0) & (xx + k % 3 - 1 < W))
        .astype(np.float32).reshape(HW)
        for k in range(9)])                                    # (9, HW)
    # Replicate across Cp sublanes, tile across the fused images -> (9*Cp, N).
    masks_blk = np.repeat(masks_np[:, None, :], Cp, axis=1)    # (9, Cp, HW)
    masks_blk = np.tile(masks_blk, (1, 1, nimg)).reshape(9 * Cp, Nblk)
    masks = jnp.asarray(masks_blk)

    def pack_w(w_hwio, cin, cout):
        # One lane-dense weight slab per conv: W2d[co, k*Cp + ci]; time
        # channel (input index 0) dropped (folded into the additive bias).
        wt = jnp.transpose(w_hwio[:, :, 1:, :], (0, 1, 3, 2))
        wt = wt.reshape(9, cout, cin).astype(jnp.float32)
        wt = jnp.pad(wt, ((0, 0), (0, Cp - cout), (0, Cp - cin)))
        return jnp.transpose(wt, (1, 0, 2)).reshape(Cp, 9 * Cp)

    def time_tap_image(w_hwio, cout):
        # conv(ones, w[:,:,0,:]) under SAME zero padding == sum_k mask_k * w_k.
        wt = jnp.reshape(w_hwio[:, :, 0, :], (9, cout)).astype(jnp.float32)
        s = jnp.einsum("kp,kc->cp", jnp.asarray(masks_np), wt)  # (cout, HW)
        return jnp.pad(s, ((0, Cp - cout), (0, 0)))             # (Cp, HW)

    w1p, w2p = pack_w(w1, C, Ch), pack_w(w2, Ch, C)
    s1, s2 = time_tap_image(w1, Ch), time_tap_image(w2, C)
    b1p = jnp.pad(b1.astype(jnp.float32), (0, Cp - Ch))
    b2p = jnp.pad(b2.astype(jnp.float32), (0, Cp - C))

    kernel = functools.partial(odefunc_kernel, W=W)
    call = pl.pallas_call(
        kernel,
        out_shape=jax.ShapeDtypeStruct((Cp, B_pad * HW), jnp.float32),
        grid_spec=pltpu.PrefetchScalarGridSpec(
            num_scalar_prefetch=0,
            grid=(nsteps,),
            in_specs=[
                pl.BlockSpec((Cp, Nblk), lambda b: (0, b)),          # x
                pl.BlockSpec((9 * Cp, Nblk), lambda b: (0, 0)),      # tap masks
                pl.BlockSpec((Cp, 9 * Cp), lambda b: (0, 0)),        # w1 slab
                pl.BlockSpec((Cp, Nblk), lambda b: (0, b)),          # t-bias 1
                pl.BlockSpec((Cp, 9 * Cp), lambda b: (0, 0)),        # w2 slab
                pl.BlockSpec((Cp, Nblk), lambda b: (0, b)),          # t-bias 2
            ],
            out_specs=pl.BlockSpec((Cp, Nblk), lambda b: (0, b)),
            scratch_shapes=[pltpu.VMEM((9 * Cp, Nblk), jnp.float32)],  # im2col
        ),
        compiler_params=pltpu.CompilerParams(
            dimension_semantics=("parallel",)),
    )

    @jax.jit
    def forward(t, x_nchw):
        t_pad = jnp.pad(_t_vec(t, B), (0, B_pad - B))
        # NCHW -> lane-dense (Cp, B_pad*H*W): spatial+batch on lanes, channels
        # (zero-padded to Cp) on sublanes.
        x_flat = jnp.transpose(x_nchw.astype(jnp.float32),
                               (1, 0, 2, 3)).reshape(C, B * HW)
        x_pad = jnp.pad(x_flat, ((0, Cp - C), (0, (B_pad - B) * HW)))

        def tbias(s, bp):
            # Exact fold of the constant-t concat channel + conv bias.
            img = t_pad[None, :, None] * s[:, None, :] + bp[:, None, None]
            return img.reshape(Cp, B_pad * HW)

        out_flat = call(x_pad, masks, w1p, tbias(s1, b1p), w2p, tbias(s2, b2p))
        out = out_flat[:C, :B * HW].reshape(C, B, H, W)
        return jnp.transpose(out, (1, 0, 2, 3))

    return forward


def ref_forward(t, x_nchw, params):
    """Pure-JAX reference mirroring the PyTorch forward (NCHW, HWIO weights)."""
    w1, b1, w2, b2 = params
    B, C, H, W = x_nchw.shape
    t_vec = _t_vec(t, B)

    def concat_conv(inp, w, b):
        tt = jnp.broadcast_to(t_vec.reshape(B, 1, 1, 1), (B, 1, H, W))
        cat = jnp.concatenate([tt, inp], axis=1)   # torch.cat([tt, x], dim=1)
        out = jax.lax.conv_general_dilated(
            cat, w, (1, 1), "SAME",
            dimension_numbers=("NCHW", "HWIO", "NCHW"),
            precision=jax.lax.Precision.HIGHEST)
        return out + b.reshape(1, -1, 1, 1)

    out = jnp.maximum(x_nchw, 0.0)
    out = concat_conv(out, w1, b1)
    out = jnp.maximum(out, 0.0)
    out = concat_conv(out, w2, b2)
    return out


if __name__ == "__main__":
    key = jax.random.PRNGKey(0)
    kx, kw1, kb1, kw2, kb2 = jax.random.split(key, 5)

    B, dim, H, W = 2, 4, 16, 16
    hidden = dim  # hidden_dim=0 -> hidden_dim=dim ; add_blocks=0

    # NCHW input like the PyTorch module, scalar t.
    x_nchw = jax.random.normal(kx, (B, dim, H, W), jnp.float32)
    t = jnp.float32(0.7)

    # Deterministic parameter init (PyTorch-like uniform fan-in scaling);
    # weights stored HWIO with the time channel at input index 0.
    lim1 = 1.0 / float(np.sqrt((dim + 1) * 9))
    w1 = jax.random.uniform(kw1, (3, 3, dim + 1, hidden), jnp.float32, -lim1, lim1)
    b1 = jax.random.uniform(kb1, (hidden,), jnp.float32, -lim1, lim1)
    lim2 = 1.0 / float(np.sqrt((hidden + 1) * 9))
    w2 = jax.random.uniform(kw2, (3, 3, hidden + 1, dim), jnp.float32, -lim2, lim2)
    b2 = jax.random.uniform(kb2, (dim,), jnp.float32, -lim2, lim2)
    params = (w1, b1, w2, b2)

    forward = make_conv_odefunc(params, x_nchw.shape)   # statics hoisted here
    out = forward(t, x_nchw)
    jax.block_until_ready(out)

    ref = ref_forward(t, x_nchw, params)
    np.testing.assert_allclose(np.asarray(out), np.asarray(ref),
                               atol=1e-5, rtol=1e-5)
    print("KERNEL_OK")
</pallas_src>

<mosaic_0001>
module attributes {stable_mosaic.version = 11 : i64} {
  func.func @odefunc_kernel(%arg0: i32, %arg1: memref<8x512xf32, #tpu.memory_space<vmem>>, %arg2: memref<72x512xf32, #tpu.memory_space<vmem>>, %arg3: memref<8x72xf32, #tpu.memory_space<vmem>>, %arg4: memref<8x512xf32, #tpu.memory_space<vmem>>, %arg5: memref<8x72xf32, #tpu.memory_space<vmem>>, %arg6: memref<8x512xf32, #tpu.memory_space<vmem>>, %arg7: memref<8x512xf32, #tpu.memory_space<vmem>>, %arg8: memref<72x512xf32, #tpu.memory_space<vmem>>) attributes {dimension_semantics = [#tpu.dimension_semantics<parallel>], iteration_bounds = array<i64: 1>, scalar_prefetch = 0 : i64, scratch_operands = 1 : i64, tpu.core_type = #tpu.core_type<tc>, window_params = [{transform_indices = @transform_0, window_bounds = array<i64: 8, 512>}, {pipeline_mode = #tpu.pipeline_mode<synchronous>, transform_indices = @transform_1, window_bounds = array<i64: 72, 512>}, {pipeline_mode = #tpu.pipeline_mode<synchronous>, transform_indices = @transform_2, window_bounds = array<i64: 8, 72>}, {transform_indices = @transform_3, window_bounds = array<i64: 8, 512>}, {pipeline_mode = #tpu.pipeline_mode<synchronous>, transform_indices = @transform_4, window_bounds = array<i64: 8, 72>}, {transform_indices = @transform_5, window_bounds = array<i64: 8, 512>}, {transform_indices = @transform_6, window_bounds = array<i64: 8, 512>}]} {
    %c0 = arith.constant 0 : index
    %c0_0 = arith.constant 0 : index
    %0 = vector.load %arg1[%c0, %c0_0] : memref<8x512xf32, #tpu.memory_space<vmem>>, vector<8x512xf32>
    %cst = arith.constant 0.000000e+00 : f32
    %1 = vector.broadcast %cst : f32 to vector<8x512xf32>
    %2 = arith.maximumf %0, %1 : vector<8x512xf32>
    %c0_1 = arith.constant 0 : index
    %c0_2 = arith.constant 0 : index
    %3 = vector.load %arg4[%c0_1, %c0_2] : memref<8x512xf32, #tpu.memory_space<vmem>>, vector<8x512xf32>
    %c17_i32 = arith.constant 17 : i32
    %4 = tpu.dynamic_rotate %2 by %c17_i32 dim 1 : vector<8x512xf32>, i32 -> vector<8x512xf32>
    %c0_3 = arith.constant 0 : index
    %c0_4 = arith.constant 0 : index
    %5 = vector.load %arg2[%c0_3, %c0_4] : memref<72x512xf32, #tpu.memory_space<vmem>>, vector<8x512xf32>
    %6 = arith.mulf %4, %5 : vector<8x512xf32>
    %c0_5 = arith.constant 0 : index
    %c0_6 = arith.constant 0 : index
    %7 = vector.load %arg8[%c0_5, %c0_6] : memref<72x512xf32, #tpu.memory_space<vmem>>, vector<8x512xf32>
    tpu.vector_store %arg8[%c0_5, %c0_6], %6 {strides = array<i32>} : memref<72x512xf32, #tpu.memory_space<vmem>>, vector<8x512xf32>,
    %c16_i32 = arith.constant 16 : i32
    %8 = tpu.dynamic_rotate %2 by %c16_i32 dim 1 : vector<8x512xf32>, i32 -> vector<8x512xf32>
    %c8 = arith.constant 8 : index
    %c0_7 = arith.constant 0 : index
    %9 = vector.load %arg2[%c8, %c0_7] : memref<72x512xf32, #tpu.memory_space<vmem>>, vector<8x512xf32>
    %10 = arith.mulf %8, %9 : vector<8x512xf32>
    %c8_8 = arith.constant 8 : index
    %c0_9 = arith.constant 0 : index
    %11 = vector.load %arg8[%c8_8, %c0_9] : memref<72x512xf32, #tpu.memory_space<vmem>>, vector<8x512xf32>
    tpu.vector_store %arg8[%c8_8, %c0_9], %10 {strides = array<i32>} : memref<72x512xf32, #tpu.memory_space<vmem>>, vector<8x512xf32>,
    %c15_i32 = arith.constant 15 : i32
    %12 = tpu.dynamic_rotate %2 by %c15_i32 dim 1 : vector<8x512xf32>, i32 -> vector<8x512xf32>
    %c16 = arith.constant 16 : index
    %c0_10 = arith.constant 0 : index
    %13 = vector.load %arg2[%c16, %c0_10] : memref<72x512xf32, #tpu.memory_space<vmem>>, vector<8x512xf32>
    %14 = arith.mulf %12, %13 : vector<8x512xf32>
    %c16_11 = arith.constant 16 : index
    %c0_12 = arith.constant 0 : index
    %15 = vector.load %arg8[%c16_11, %c0_12] : memref<72x512xf32, #tpu.memory_space<vmem>>, vector<8x512xf32>
    tpu.vector_store %arg8[%c16_11, %c0_12], %14 {strides = array<i32>} : memref<72x512xf32, #tpu.memory_space<vmem>>, vector<8x512xf32>,
    %c1_i32 = arith.constant 1 : i32
    %16 = tpu.dynamic_rotate %2 by %c1_i32 dim 1 : vector<8x512xf32>, i32 -> vector<8x512xf32>
    %c24 = arith.constant 24 : index
    %c0_13 = arith.constant 0 : index
    %17 = vector.load %arg2[%c24, %c0_13] : memref<72x512xf32, #tpu.memory_space<vmem>>, vector<8x512xf32>
    %18 = arith.mulf %16, %17 : vector<8x512xf32>
    %c24_14 = arith.constant 24 : index
    %c0_15 = arith.constant 0 : index
    %19 = vector.load %arg8[%c24_14, %c0_15] : memref<72x512xf32, #tpu.memory_space<vmem>>, vector<8x512xf32>
    tpu.vector_store %arg8[%c24_14, %c0_15], %18 {strides = array<i32>} : memref<72x512xf32, #tpu.memory_space<vmem>>, vector<8x512xf32>,
    %c32 = arith.constant 32 : index
    %c0_16 = arith.constant 0 : index
    %20 = vector.load %arg8[%c32, %c0_16] : memref<72x512xf32, #tpu.memory_space<vmem>>, vector<8x512xf32>
    tpu.vector_store %arg8[%c32, %c0_16], %2 {strides = array<i32>} : memref<72x512xf32, #tpu.memory_space<vmem>>, vector<8x512xf32>,
    %c511_i32 = arith.constant 511 : i32
    %21 = tpu.dynamic_rotate %2 by %c511_i32 dim 1 : vector<8x512xf32>, i32 -> vector<8x512xf32>
    %c40 = arith.constant 40 : index
    %c0_17 = arith.constant 0 : index
    %22 = vector.load %arg2[%c40, %c0_17] : memref<72x512xf32, #tpu.memory_space<vmem>>, vector<8x512xf32>
    %23 = arith.mulf %21, %22 : vector<8x512xf32>
    %c40_18 = arith.constant 40 : index
    %c0_19 = arith.constant 0 : index
    %24 = vector.load %arg8[%c40_18, %c0_19] : memref<72x512xf32, #tpu.memory_space<vmem>>, vector<8x512xf32>
    tpu.vector_store %arg8[%c40_18, %c0_19], %23 {strides = array<i32>} : memref<72x512xf32, #tpu.memory_space<vmem>>, vector<8x512xf32>,
    %c497_i32 = arith.constant 497 : i32
    %25 = tpu.dynamic_rotate %2 by %c497_i32 dim 1 : vector<8x512xf32>, i32 -> vector<8x512xf32>
    %c48 = arith.constant 48 : index
    %c0_20 = arith.constant 0 : index
    %26 = vector.load %arg2[%c48, %c0_20] : memref<72x512xf32, #tpu.memory_space<vmem>>, vector<8x512xf32>
    %27 = arith.mulf %25, %26 : vector<8x512xf32>
    %c48_21 = arith.constant 48 : index
    %c0_22 = arith.constant 0 : index
    %28 = vector.load %arg8[%c48_21, %c0_22] : memref<72x512xf32, #tpu.memory_space<vmem>>, vector<8x512xf32>
    tpu.vector_store %arg8[%c48_21, %c0_22], %27 {strides = array<i32>} : memref<72x512xf32, #tpu.memory_space<vmem>>, vector<8x512xf32>,
    %c496_i32 = arith.constant 496 : i32
    %29 = tpu.dynamic_rotate %2 by %c496_i32 dim 1 : vector<8x512xf32>, i32 -> vector<8x512xf32>
    %c56 = arith.constant 56 : index
    %c0_23 = arith.constant 0 : index
    %30 = vector.load %arg2[%c56, %c0_23] : memref<72x512xf32, #tpu.memory_space<vmem>>, vector<8x512xf32>
    %31 = arith.mulf %29, %30 : vector<8x512xf32>
    %c56_24 = arith.constant 56 : index
    %c0_25 = arith.constant 0 : index
    %32 = vector.load %arg8[%c56_24, %c0_25] : memref<72x512xf32, #tpu.memory_space<vmem>>, vector<8x512xf32>
    tpu.vector_store %arg8[%c56_24, %c0_25], %31 {strides = array<i32>} : memref<72x512xf32, #tpu.memory_space<vmem>>, vector<8x512xf32>,
    %c495_i32 = arith.constant 495 : i32
    %33 = tpu.dynamic_rotate %2 by %c495_i32 dim 1 : vector<8x512xf32>, i32 -> vector<8x512xf32>
    %c64 = arith.constant 64 : index
    %c0_26 = arith.constant 0 : index
    %34 = vector.load %arg2[%c64, %c0_26] : memref<72x512xf32, #tpu.memory_space<vmem>>, vector<8x512xf32>
    %35 = arith.mulf %33, %34 : vector<8x512xf32>
    %c64_27 = arith.constant 64 : index
    %c0_28 = arith.constant 0 : index
    %36 = vector.load %arg8[%c64_27, %c0_28] : memref<72x512xf32, #tpu.memory_space<vmem>>, vector<8x512xf32>
    tpu.vector_store %arg8[%c64_27, %c0_28], %35 {strides = array<i32>} : memref<72x512xf32, #tpu.memory_space<vmem>>, vector<8x512xf32>,
    %c0_29 = arith.constant 0 : index
    %c0_30 = arith.constant 0 : index
    %37 = vector.load %arg3[%c0_29, %c0_30] : memref<8x72xf32, #tpu.memory_space<vmem>>, vector<8x72xf32>
    %c0_31 = arith.constant 0 : index
    %c0_32 = arith.constant 0 : index
    %38 = vector.load %arg8[%c0_31, %c0_32] : memref<72x512xf32, #tpu.memory_space<vmem>>, vector<72x512xf32>
    %cst_33 = arith.constant dense<0.000000e+00> : vector<8x512xf32>
    %39 = tpu.matmul %37, %38, %cst_33 {dimension_numbers = #tpu.dot_dimension_numbers<[1], [0], [0], [1], [0, 0, 1, 1], [], []>} : vector<8x72xf32>, vector<72x512xf32>, vector<8x512xf32> -> vector<8x512xf32>
    %40 = arith.addf %3, %39 : vector<8x512xf32>
    %cst_34 = arith.constant 0.000000e+00 : f32
    %41 = vector.broadcast %cst_34 : f32 to vector<8x512xf32>
    %42 = arith.maximumf %40, %41 : vector<8x512xf32>
    %c0_35 = arith.constant 0 : index
    %c0_36 = arith.constant 0 : index
    %43 = vector.load %arg6[%c0_35, %c0_36] : memref<8x512xf32, #tpu.memory_space<vmem>>, vector<8x512xf32>
    %c17_i32_37 = arith.constant 17 : i32
    %44 = tpu.dynamic_rotate %42 by %c17_i32_37 dim 1 : vector<8x512xf32>, i32 -> vector<8x512xf32>
    %c0_38 = arith.constant 0 : index
    %c0_39 = arith.constant 0 : index
    %45 = vector.load %arg2[%c0_38, %c0_39] : memref<72x512xf32, #tpu.memory_space<vmem>>, vector<8x512xf32>
    %46 = arith.mulf %44, %45 : vector<8x512xf32>
    %c0_40 = arith.constant 0 : index
    %c0_41 = arith.constant 0 : index
    %47 = vector.load %arg8[%c0_40, %c0_41] : memref<72x512xf32, #tpu.memory_space<vmem>>, vector<8x512xf32>
    tpu.vector_store %arg8[%c0_40, %c0_41], %46 {strides = array<i32>} : memref<72x512xf32, #tpu.memory_space<vmem>>, vector<8x512xf32>,
    %c16_i32_42 = arith.constant 16 : i32
    %48 = tpu.dynamic_rotate %42 by %c16_i32_42 dim 1 : vector<8x512xf32>, i32 -> vector<8x512xf32>
    %c8_43 = arith.constant 8 : index
    %c0_44 = arith.constant 0 : index
    %49 = vector.load %arg2[%c8_43, %c0_44] : memref<72x512xf32, #tpu.memory_space<vmem>>, vector<8x512xf32>
    %50 = arith.mulf %48, %49 : vector<8x512xf32>
    %c8_45 = arith.constant 8 : index
    %c0_46 = arith.constant 0 : index
    %51 = vector.load %arg8[%c8_45, %c0_46] : memref<72x512xf32, #tpu.memory_space<vmem>>, vector<8x512xf32>
    tpu.vector_store %arg8[%c8_45, %c0_46], %50 {strides = array<i32>} : memref<72x512xf32, #tpu.memory_space<vmem>>, vector<8x512xf32>,
    %c15_i32_47 = arith.constant 15 : i32
    %52 = tpu.dynamic_rotate %42 by %c15_i32_47 dim 1 : vector<8x512xf32>, i32 -> vector<8x512xf32>
    %c16_48 = arith.constant 16 : index
    %c0_49 = arith.constant 0 : index
    %53 = vector.load %arg2[%c16_48, %c0_49] : memref<72x512xf32, #tpu.memory_space<vmem>>, vector<8x512xf32>
    %54 = arith.mulf %52, %53 : vector<8x512xf32>
    %c16_50 = arith.constant 16 : index
    %c0_51 = arith.constant 0 : index
    %55 = vector.load %arg8[%c16_50, %c0_51] : memref<72x512xf32, #tpu.memory_space<vmem>>, vector<8x512xf32>
    tpu.vector_store %arg8[%c16_50, %c0_51], %54 {strides = array<i32>} : memref<72x512xf32, #tpu.memory_space<vmem>>, vector<8x512xf32>,
    %c1_i32_52 = arith.constant 1 : i32
    %56 = tpu.dynamic_rotate %42 by %c1_i32_52 dim 1 : vector<8x512xf32>, i32 -> vector<8x512xf32>
    %c24_53 = arith.constant 24 : index
    %c0_54 = arith.constant 0 : index
    %57 = vector.load %arg2[%c24_53, %c0_54] : memref<72x512xf32, #tpu.memory_space<vmem>>, vector<8x512xf32>
    %58 = arith.mulf %56, %57 : vector<8x512xf32>
    %c24_55 = arith.constant 24 : index
    %c0_56 = arith.constant 0 : index
    %59 = vector.load %arg8[%c24_55, %c0_56] : memref<72x512xf32, #tpu.memory_space<vmem>>, vector<8x512xf32>
    tpu.vector_store %arg8[%c24_55, %c0_56], %58 {strides = array<i32>} : memref<72x512xf32, #tpu.memory_space<vmem>>, vector<8x512xf32>,
    %c32_57 = arith.constant 32 : index
    %c0_58 = arith.constant 0 : index
    %60 = vector.load %arg8[%c32_57, %c0_58] : memref<72x512xf32, #tpu.memory_space<vmem>>, vector<8x512xf32>
    tpu.vector_store %arg8[%c32_57, %c0_58], %42 {strides = array<i32>} : memref<72x512xf32, #tpu.memory_space<vmem>>, vector<8x512xf32>,
    %c511_i32_59 = arith.constant 511 : i32
    %61 = tpu.dynamic_rotate %42 by %c511_i32_59 dim 1 : vector<8x512xf32>, i32 -> vector<8x512xf32>
    %c40_60 = arith.constant 40 : index
    %c0_61 = arith.constant 0 : index
    %62 = vector.load %arg2[%c40_60, %c0_61] : memref<72x512xf32, #tpu.memory_space<vmem>>, vector<8x512xf32>
    %63 = arith.mulf %61, %62 : vector<8x512xf32>
    %c40_62 = arith.constant 40 : index
    %c0_63 = arith.constant 0 : index
    %64 = vector.load %arg8[%c40_62, %c0_63] : memref<72x512xf32, #tpu.memory_space<vmem>>, vector<8x512xf32>
    tpu.vector_store %arg8[%c40_62, %c0_63], %63 {strides = array<i32>} : memref<72x512xf32, #tpu.memory_space<vmem>>, vector<8x512xf32>,
    %c497_i32_64 = arith.constant 497 : i32
    %65 = tpu.dynamic_rotate %42 by %c497_i32_64 dim 1 : vector<8x512xf32>, i32 -> vector<8x512xf32>
    %c48_65 = arith.constant 48 : index
    %c0_66 = arith.constant 0 : index
    %66 = vector.load %arg2[%c48_65, %c0_66] : memref<72x512xf32, #tpu.memory_space<vmem>>, vector<8x512xf32>
    %67 = arith.mulf %65, %66 : vector<8x512xf32>
    %c48_67 = arith.constant 48 : index
    %c0_68 = arith.constant 0 : index
    %68 = vector.load %arg8[%c48_67, %c0_68] : memref<72x512xf32, #tpu.memory_space<vmem>>, vector<8x512xf32>
    tpu.vector_store %arg8[%c48_67, %c0_68], %67 {strides = array<i32>} : memref<72x512xf32, #tpu.memory_space<vmem>>, vector<8x512xf32>,
    %c496_i32_69 = arith.constant 496 : i32
    %69 = tpu.dynamic_rotate %42 by %c496_i32_69 dim 1 : vector<8x512xf32>, i32 -> vector<8x512xf32>
    %c56_70 = arith.constant 56 : index
    %c0_71 = arith.constant 0 : index
    %70 = vector.load %arg2[%c56_70, %c0_71] : memref<72x512xf32, #tpu.memory_space<vmem>>, vector<8x512xf32>
    %71 = arith.mulf %69, %70 : vector<8x512xf32>
    %c56_72 = arith.constant 56 : index
    %c0_73 = arith.constant 0 : index
    %72 = vector.load %arg8[%c56_72, %c0_73] : memref<72x512xf32, #tpu.memory_space<vmem>>, vector<8x512xf32>
    tpu.vector_store %arg8[%c56_72, %c0_73], %71 {strides = array<i32>} : memref<72x512xf32, #tpu.memory_space<vmem>>, vector<8x512xf32>,
    %c495_i32_74 = arith.constant 495 : i32
    %73 = tpu.dynamic_rotate %42 by %c495_i32_74 dim 1 : vector<8x512xf32>, i32 -> vector<8x512xf32>
    %c64_75 = arith.constant 64 : index
    %c0_76 = arith.constant 0 : index
    %74 = vector.load %arg2[%c64_75, %c0_76] : memref<72x512xf32, #tpu.memory_space<vmem>>, vector<8x512xf32>
    %75 = arith.mulf %73, %74 : vector<8x512xf32>
    %c64_77 = arith.constant 64 : index
    %c0_78 = arith.constant 0 : index
    %76 = vector.load %arg8[%c64_77, %c0_78] : memref<72x512xf32, #tpu.memory_space<vmem>>, vector<8x512xf32>
    tpu.vector_store %arg8[%c64_77, %c0_78], %75 {strides = array<i32>} : memref<72x512xf32, #tpu.memory_space<vmem>>, vector<8x512xf32>,
    %c0_79 = arith.constant 0 : index
    %c0_80 = arith.constant 0 : index
    %77 = vector.load %arg5[%c0_79, %c0_80] : memref<8x72xf32, #tpu.memory_space<vmem>>, vector<8x72xf32>
    %c0_81 = arith.constant 0 : index
    %c0_82 = arith.constant 0 : index
    %78 = vector.load %arg8[%c0_81, %c0_82] : memref<72x512xf32, #tpu.memory_space<vmem>>, vector<72x512xf32>
    %cst_83 = arith.constant dense<0.000000e+00> : vector<8x512xf32>
    %79 = tpu.matmul %77, %78, %cst_83 {dimension_numbers = #tpu.dot_dimension_numbers<[1], [0], [0], [1], [0, 0, 1, 1], [], []>} : vector<8x72xf32>, vector<72x512xf32>, vector<8x512xf32> -> vector<8x512xf32>
    %80 = arith.addf %43, %79 : vector<8x512xf32>
    %c0_84 = arith.constant 0 : index
    %c0_85 = arith.constant 0 : index
    %81 = vector.load %arg7[%c0_84, %c0_85] : memref<8x512xf32, #tpu.memory_space<vmem>>, vector<8x512xf32>
    tpu.vector_store %arg7[%c0_84, %c0_85], %80 {strides = array<i32>} : memref<8x512xf32, #tpu.memory_space<vmem>>, vector<8x512xf32>,
    return
  }
  func.func @transform_0(%arg0: i32) -> (i32, i32) {
    %c0_i32 = arith.constant 0 : i32
    %c0_i32_0 = arith.constant 0 : i32
    return %c0_i32, %arg0 : i32, i32
  }
  func.func @transform_1(%arg0: i32) -> (i32, i32) {
    %c0_i32 = arith.constant 0 : i32
    %c0_i32_0 = arith.constant 0 : i32
    %c0_i32_1 = arith.constant 0 : i32
    return %c0_i32, %c0_i32_0 : i32, i32
  }
  func.func @transform_2(%arg0: i32) -> (i32, i32) {
    %c0_i32 = arith.constant 0 : i32
    %c0_i32_0 = arith.constant 0 : i32
    %c0_i32_1 = arith.constant 0 : i32
    return %c0_i32, %c0_i32_0 : i32, i32
  }
  func.func @transform_3(%arg0: i32) -> (i32, i32) {
    %c0_i32 = arith.constant 0 : i32
    %c0_i32_0 = arith.constant 0 : i32
    return %c0_i32, %arg0 : i32, i32
  }
  func.func @transform_4(%arg0: i32) -> (i32, i32) {
    %c0_i32 = arith.constant 0 : i32
    %c0_i32_0 = arith.constant 0 : i32
    %c0_i32_1 = arith.constant 0 : i32
    return %c0_i32, %c0_i32_0 : i32, i32
  }
  func.func @transform_5(%arg0: i32) -> (i32, i32) {
    %c0_i32 = arith.constant 0 : i32
    %c0_i32_0 = arith.constant 0 : i32
    return %c0_i32, %arg0 : i32, i32
  }
  func.func @transform_6(%arg0: i32) -> (i32, i32) {
    %c0_i32 = arith.constant 0 : i32
    %c0_i32_0 = arith.constant 0 : i32
    return %c0_i32, %arg0 : i32, i32
  }
}

</mosaic_0001>

<llo_original>
// kernel: forward.1
$region0: #{forward.1}
  #allocation0 [shape = 'u32[]', space=smem, size = 0x4, offset = 0x4, fixed_abs, tag = 'smem constant byte address 0x4 - core index']
  #allocation1 [shape = 'u32[72,128]{1,0:T(1,128)}', space=vmem, size = 0x9000, scoped, tag = 'internal scratch']
  #allocation2 [shape = 'f32[72,512]{1,0:T(8,128)}', space=vmem, size = 0x24000, scoped, tag = 'scratch operand']
  %s0 = inlined_call_operand.vmem [shape: f32[8,512], index: 0, kind: input, shape index: {}]
  %s1 = inlined_call_operand.vmem [shape: f32[72,512], index: 1, kind: input, shape index: {}]
  %s2 = inlined_call_operand.vmem [shape: f32[8,72], index: 2, kind: input, shape index: {}]
  %s3 = inlined_call_operand.vmem [shape: f32[8,512], index: 3, kind: input, shape index: {}]
  %s4 = inlined_call_operand.vmem [shape: f32[8,72], index: 4, kind: input, shape index: {}]
  %s5 = inlined_call_operand.vmem [shape: f32[8,512], index: 5, kind: input, shape index: {}]
  %s6 = inlined_call_operand.vmem [shape: f32[8,512], index: 6, kind: output, shape index: {}]
  %s7 = sld [smem:[#allocation0]]
  $region34: #{forward.1} parent=0
    _
  %s9 = ssub.s32 1, %s7
  %s10 = scalar_select 0, %s9, %s7
  // Predicated region
  $region2: #{forward.1} parent=0 // pred_check
    _
  $region3: #{forward.1} parent=0 // pred_check_branch
    %12 = sbr.rel (0) target = $region5
  $region4: #{forward.1} parent=0 // pred_region
    _
  $region5: #{forward.1} parent=0 // pred_fallthru
    _
  // Predicated region
  $region6: #{forward.1} parent=0 // pred_check
    _
  $region7: #{forward.1} parent=0 // pred_check_branch
    %14 = sbr.rel (0) target = $region9
  $region8: #{forward.1} parent=0 // pred_region
    _
  $region9: #{forward.1} parent=0 // pred_fallthru
    _
  // Predicated region
  $region10: #{forward.1} parent=0 // pred_check
    _
  $region11: #{forward.1} parent=0 // pred_check_branch
    %16 = sbr.rel (0) target = $region13
  $region12: #{forward.1} parent=0 // pred_region
    _
  $region13: #{forward.1} parent=0 // pred_fallthru
    _
  // Predicated region
  $region14: #{forward.1} parent=0 // pred_check
    _
  $region15: #{forward.1} parent=0 // pred_check_branch
    %18 = sbr.rel (0) target = $region17
  $region16: #{forward.1} parent=0 // pred_region
    _
  $region17: #{forward.1} parent=0 // pred_fallthru
    _
  // Predicated region
  $region18: #{forward.1} parent=0 // pred_check
    _
  $region19: #{forward.1} parent=0 // pred_check_branch
    %20 = sbr.rel (0) target = $region21
  $region20: #{forward.1} parent=0 // pred_region
    _
  $region21: #{forward.1} parent=0 // pred_fallthru
    _
  // Predicated region
  $region22: #{forward.1} parent=0 // pred_check
    _
  $region23: #{forward.1} parent=0 // pred_check_branch
    %22 = sbr.rel (0) target = $region25
  $region24: #{forward.1} parent=0 // pred_region
    _
  $region25: #{forward.1} parent=0 // pred_fallthru
    _
  %v23 = vld [vmem:[%s0] sm:$0xff]
  %v24 = vld [vmem:[%s0 + $0x8] sm:$0xff]
  %v25 = vld [vmem:[%s0 + $0x10] sm:$0xff]
  %v26 = vld [vmem:[%s0 + $0x18] sm:$0xff]
  %v27 = vmax.f32 %v23, 0.0
  %v28 = vmax.f32 %v24, 0.0
  %v29 = vmax.f32 %v25, 0.0
  %v30 = vmax.f32 %v26, 0.0
  %v31 = vld [vmem:[%s3] sm:$0xff]
  %v32 = vld [vmem:[%s3 + $0x8] sm:$0xff]
  %v33 = vld [vmem:[%s3 + $0x10] sm:$0xff]
  %v34 = vld [vmem:[%s3 + $0x18] sm:$0xff]
  %35 = vrot.lane.b32.xlu0 %v27, 17
  %v36 = vpop.permute.xlu0 %35
  %37 = vrot.lane.b32.xlu0 %v28, 17
  %v38 = vpop.permute.xlu0 %37
  %39 = vrot.lane.b32.xlu0 %v29, 17
  %v40 = vpop.permute.xlu0 %39
  %41 = vrot.lane.b32.xlu0 %v30, 17
  %v42 = vpop.permute.xlu0 %41
  %v43 = vlaneseq
  %v44 = vand.u32 %v43, 127
  %vm45 = vcmp.lt.s32.totalorder %v44, 17
  %v46 = vsel %vm45, %v40, %v42
  %v47 = vsel %vm45, %v38, %v40
  %v48 = vsel %vm45, %v36, %v38
  %v49 = vsel %vm45, %v42, %v36
  %v50 = vld [vmem:[%s1] sm:$0xff]
  %v51 = vld [vmem:[%s1 + $0x8] sm:$0xff]
  %v52 = vld [vmem:[%s1 + $0x10] sm:$0xff]
  %v53 = vld [vmem:[%s1 + $0x18] sm:$0xff]
  %v54 = vmul.f32 %v49, %v50
  %v55 = vmul.f32 %v48, %v51
  %v56 = vmul.f32 %v47, %v52
  %v57 = vmul.f32 %v46, %v53
  %58 = vst [vmem:[#allocation2] sm:$0xff] %v54
  %59 = vst [vmem:[#allocation2 + $0x8] sm:$0xff] %v55
  %60 = vst [vmem:[#allocation2 + $0x10] sm:$0xff] %v56
  %61 = vst [vmem:[#allocation2 + $0x18] sm:$0xff] %v57
  %62 = vrot.lane.b32.xlu0 %v27, 16
  %v63 = vpop.permute.xlu0 %62
  %64 = vrot.lane.b32.xlu0 %v28, 16
  %v65 = vpop.permute.xlu0 %64
  %66 = vrot.lane.b32.xlu0 %v29, 16
  %v67 = vpop.permute.xlu0 %66
  %68 = vrot.lane.b32.xlu0 %v30, 16
  %v69 = vpop.permute.xlu0 %68
  %vm70 = vcmp.lt.s32.totalorder %v44, 16
  %v71 = vsel %vm70, %v67, %v69
  %v72 = vsel %vm70, %v65, %v67
  %v73 = vsel %vm70, %v63, %v65
  %v74 = vsel %vm70, %v69, %v63
  %v75 = vld [vmem:[%s1 + $0x20] sm:$0xff]
  %v76 = vld [vmem:[%s1 + $0x28] sm:$0xff]
  %v77 = vld [vmem:[%s1 + $0x30] sm:$0xff]
  %v78 = vld [vmem:[%s1 + $0x38] sm:$0xff]
  %v79 = vmul.f32 %v74, %v75
  %v80 = vmul.f32 %v73, %v76
  %v81 = vmul.f32 %v72, %v77
  %v82 = vmul.f32 %v71, %v78
  %83 = vst [vmem:[#allocation2 + $0x20] sm:$0xff] %v79
  %84 = vst [vmem:[#allocation2 + $0x28] sm:$0xff] %v80
  %85 = vst [vmem:[#allocation2 + $0x30] sm:$0xff] %v81
  %86 = vst [vmem:[#allocation2 + $0x38] sm:$0xff] %v82
  %87 = vrot.lane.b32.xlu0 %v27, 15
  %v88 = vpop.permute.xlu0 %87
  %89 = vrot.lane.b32.xlu0 %v28, 15
  %v90 = vpop.permute.xlu0 %89
  %91 = vrot.lane.b32.xlu0 %v29, 15
  %v92 = vpop.permute.xlu0 %91
  %93 = vrot.lane.b32.xlu0 %v30, 15
  %v94 = vpop.permute.xlu0 %93
  %vm95 = vcmp.lt.s32.totalorder %v44, 15
  %v96 = vsel %vm95, %v92, %v94
  %v97 = vsel %vm95, %v90, %v92
  %v98 = vsel %vm95, %v88, %v90
  %v99 = vsel %vm95, %v94, %v88
  %v100 = vld [vmem:[%s1 + $0x40] sm:$0xff]
  %v101 = vld [vmem:[%s1 + $0x48] sm:$0xff]
  %v102 = vld [vmem:[%s1 + $0x50] sm:$0xff]
  %v103 = vld [vmem:[%s1 + $0x58] sm:$0xff]
  %v104 = vmul.f32 %v99, %v100
  %v105 = vmul.f32 %v98, %v101
  %v106 = vmul.f32 %v97, %v102
  %v107 = vmul.f32 %v96, %v103
  %108 = vst [vmem:[#allocation2 + $0x40] sm:$0xff] %v104
  %109 = vst [vmem:[#allocation2 + $0x48] sm:$0xff] %v105
  %110 = vst [vmem:[#allocation2 + $0x50] sm:$0xff] %v106
  %111 = vst [vmem:[#allocation2 + $0x58] sm:$0xff] %v107
  %112 = vrot.lane.b32.xlu0 %v27, 1
  %v113 = vpop.permute.xlu0 %112
  %114 = vrot.lane.b32.xlu0 %v28, 1
  %v115 = vpop.permute.xlu0 %114
  %116 = vrot.lane.b32.xlu0 %v29, 1
  %v117 = vpop.permute.xlu0 %116
  %118 = vrot.lane.b32.xlu0 %v30, 1
  %v119 = vpop.permute.xlu0 %118
  %vm120 = vcmp.lt.s32.totalorder %v44, 1
  %v121 = vsel %vm120, %v117, %v119
  %v122 = vsel %vm120, %v115, %v117
  %v123 = vsel %vm120, %v113, %v115
  %v124 = vsel %vm120, %v119, %v113
  %v125 = vld [vmem:[%s1 + $0x60] sm:$0xff]
  %v126 = vld [vmem:[%s1 + $0x68] sm:$0xff]
  %v127 = vld [vmem:[%s1 + $0x70] sm:$0xff]
  %v128 = vld [vmem:[%s1 + $0x78] sm:$0xff]
  %v129 = vmul.f32 %v124, %v125
  %v130 = vmul.f32 %v123, %v126
  %v131 = vmul.f32 %v122, %v127
  %v132 = vmul.f32 %v121, %v128
  %133 = vst [vmem:[#allocation2 + $0x60] sm:$0xff] %v129
  %134 = vst [vmem:[#allocation2 + $0x68] sm:$0xff] %v130
  %135 = vst [vmem:[#allocation2 + $0x70] sm:$0xff] %v131
  %136 = vst [vmem:[#allocation2 + $0x78] sm:$0xff] %v132
  %137 = vst [vmem:[#allocation2 + $0x80] sm:$0xff] %v27
  %138 = vst [vmem:[#allocation2 + $0x88] sm:$0xff] %v28
  %139 = vst [vmem:[#allocation2 + $0x90] sm:$0xff] %v29
  %140 = vst [vmem:[#allocation2 + $0x98] sm:$0xff] %v30
  %141 = vrot.lane.b32.xlu0 %v27, 127
  %v142 = vpop.permute.xlu0 %141
  %143 = vrot.lane.b32.xlu0 %v28, 127
  %v144 = vpop.permute.xlu0 %143
  %145 = vrot.lane.b32.xlu0 %v29, 127
  %v146 = vpop.permute.xlu0 %145
  %147 = vrot.lane.b32.xlu0 %v30, 127
  %v148 = vpop.permute.xlu0 %147
  %vm149 = vcmp.lt.s32.totalorder %v44, 127
  %v150 = vsel %vm149, %v146, %v148
  %v151 = vsel %vm149, %v144, %v146
  %v152 = vsel %vm149, %v142, %v144
  %v153 = vsel %vm149, %v148, %v142
  %v154 = vld [vmem:[%s1 + $0xa0] sm:$0xff]
  %v155 = vld [vmem:[%s1 + $0xa8] sm:$0xff]
  %v156 = vld [vmem:[%s1 + $0xb0] sm:$0xff]
  %v157 = vld [vmem:[%s1 + $0xb8] sm:$0xff]
  %v158 = vmul.f32 %v152, %v154
  %v159 = vmul.f32 %v151, %v155
  %v160 = vmul.f32 %v150, %v156
  %v161 = vmul.f32 %v153, %v157
  %162 = vst [vmem:[#allocation2 + $0xa0] sm:$0xff] %v158
  %163 = vst [vmem:[#allocation2 + $0xa8] sm:$0xff] %v159
  %164 = vst [vmem:[#allocation2 + $0xb0] sm:$0xff] %v160
  %165 = vst [vmem:[#allocation2 + $0xb8] sm:$0xff] %v161
  %166 = vrot.lane.b32.xlu0 %v27, 113
  %v167 = vpop.permute.xlu0 %166
  %168 = vrot.lane.b32.xlu0 %v28, 113
  %v169 = vpop.permute.xlu0 %168
  %170 = vrot.lane.b32.xlu0 %v29, 113
  %v171 = vpop.permute.xlu0 %170
  %172 = vrot.lane.b32.xlu0 %v30, 113
  %v173 = vpop.permute.xlu0 %172
  %vm174 = vcmp.lt.s32.totalorder %v44, 113
  %v175 = vsel %vm174, %v171, %v173
  %v176 = vsel %vm174, %v169, %v171
  %v177 = vsel %vm174, %v167, %v169
  %v178 = vsel %vm174, %v173, %v167
  %v179 = vld [vmem:[%s1 + $0xc0] sm:$0xff]
  %v180 = vld [vmem:[%s1 + $0xc8] sm:$0xff]
  %v181 = vld [vmem:[%s1 + $0xd0] sm:$0xff]
  %v182 = vld [vmem:[%s1 + $0xd8] sm:$0xff]
  %v183 = vmul.f32 %v177, %v179
  %v184 = vmul.f32 %v176, %v180
  %v185 = vmul.f32 %v175, %v181
  %v186 = vmul.f32 %v178, %v182
  %187 = vst [vmem:[#allocation2 + $0xc0] sm:$0xff] %v183
  %188 = vst [vmem:[#allocation2 + $0xc8] sm:$0xff] %v184
  %189 = vst [vmem:[#allocation2 + $0xd0] sm:$0xff] %v185
  %190 = vst [vmem:[#allocation2 + $0xd8] sm:$0xff] %v186
  %191 = vrot.lane.b32.xlu0 %v27, 112
  %v192 = vpop.permute.xlu0 %191
  %193 = vrot.lane.b32.xlu0 %v28, 112
  %v194 = vpop.permute.xlu0 %193
  %195 = vrot.lane.b32.xlu0 %v29, 112
  %v196 = vpop.permute.xlu0 %195
  %197 = vrot.lane.b32.xlu0 %v30, 112
  %v198 = vpop.permute.xlu0 %197
  %vm199 = vcmp.lt.s32.totalorder %v44, 112
  %v200 = vsel %vm199, %v196, %v198
  %v201 = vsel %vm199, %v194, %v196
  %v202 = vsel %vm199, %v192, %v194
  %v203 = vsel %vm199, %v198, %v192
  %v204 = vld [vmem:[%s1 + $0xe0] sm:$0xff]
  %v205 = vld [vmem:[%s1 + $0xe8] sm:$0xff]
  %v206 = vld [vmem:[%s1 + $0xf0] sm:$0xff]
  %v207 = vld [vmem:[%s1 + $0xf8] sm:$0xff]
  %v208 = vmul.f32 %v202, %v204
  %v209 = vmul.f32 %v201, %v205
  %v210 = vmul.f32 %v200, %v206
  %v211 = vmul.f32 %v203, %v207
  %212 = vst [vmem:[#allocation2 + $0xe0] sm:$0xff] %v208
  %213 = vst [vmem:[#allocation2 + $0xe8] sm:$0xff] %v209
  %214 = vst [vmem:[#allocation2 + $0xf0] sm:$0xff] %v210
  %215 = vst [vmem:[#allocation2 + $0xf8] sm:$0xff] %v211
  %216 = vrot.lane.b32.xlu0 %v27, 111
  %v217 = vpop.permute.xlu0 %216
  %218 = vrot.lane.b32.xlu0 %v28, 111
  %v219 = vpop.permute.xlu0 %218
  %220 = vrot.lane.b32.xlu0 %v29, 111
  %v221 = vpop.permute.xlu0 %220
  %222 = vrot.lane.b32.xlu0 %v30, 111
  %v223 = vpop.permute.xlu0 %222
  %vm224 = vcmp.lt.s32.totalorder %v44, 111
  %v225 = vsel %vm224, %v221, %v223
  %v226 = vsel %vm224, %v219, %v221
  %v227 = vsel %vm224, %v217, %v219
  %v228 = vsel %vm224, %v223, %v217
  %v229 = vld [vmem:[%s1 + $0x100] sm:$0xff]
  %v230 = vld [vmem:[%s1 + $0x108] sm:$0xff]
  %v231 = vld [vmem:[%s1 + $0x110] sm:$0xff]
  %v232 = vld [vmem:[%s1 + $0x118] sm:$0xff]
  %v233 = vmul.f32 %v227, %v229
  %v234 = vmul.f32 %v226, %v230
  %v235 = vmul.f32 %v225, %v231
  %v236 = vmul.f32 %v228, %v232
  %237 = vst [vmem:[#allocation2 + $0x100] sm:$0xff] %v233
  %238 = vst [vmem:[#allocation2 + $0x108] sm:$0xff] %v234
  %239 = vst [vmem:[#allocation2 + $0x110] sm:$0xff] %v235
  %240 = vst [vmem:[#allocation2 + $0x118] sm:$0xff] %v236
  %v241 = vld [vmem:[%s2] sm:$0xff]
  %v242 = vld [vmem:[#allocation2] sm:$0xff]
  %v243 = vld [vmem:[#allocation2 + $0x8] sm:$0xff]
  %v244 = vld [vmem:[#allocation2 + $0x10] sm:$0xff]
  %v245 = vld [vmem:[#allocation2 + $0x18] sm:$0xff]
  %v246 = vld [vmem:[#allocation2 + $0x20] sm:$0xff]
  %v247 = vld [vmem:[#allocation2 + $0x28] sm:$0xff]
  %v248 = vld [vmem:[#allocation2 + $0x30] sm:$0xff]
  %v249 = vld [vmem:[#allocation2 + $0x38] sm:$0xff]
  %v250 = vld [vmem:[#allocation2 + $0x40] sm:$0xff]
  %v251 = vld [vmem:[#allocation2 + $0x48] sm:$0xff]
  %v252 = vld [vmem:[#allocation2 + $0x50] sm:$0xff]
  %v253 = vld [vmem:[#allocation2 + $0x58] sm:$0xff]
  %v254 = vld [vmem:[#allocation2 + $0x60] sm:$0xff]
  %v255 = vld [vmem:[#allocation2 + $0x68] sm:$0xff]
  %v256 = vld [vmem:[#allocation2 + $0x70] sm:$0xff]
  %v257 = vld [vmem:[#allocation2 + $0x78] sm:$0xff]
  %v258 = vld [vmem:[#allocation2 + $0x80] sm:$0xff]
  %v259 = vld [vmem:[#allocation2 + $0x88] sm:$0xff]
  %v260 = vld [vmem:[#allocation2 + $0x90] sm:$0xff]
  %v261 = vld [vmem:[#allocation2 + $0x98] sm:$0xff]
  %v262 = vld [vmem:[#allocation2 + $0xa0] sm:$0xff]
  %v263 = vld [vmem:[#allocation2 + $0xa8] sm:$0xff]
  %v264 = vld [vmem:[#allocation2 + $0xb0] sm:$0xff]
  %v265 = vld [vmem:[#allocation2 + $0xb8] sm:$0xff]
  %v266 = vld [vmem:[#allocation2 + $0xc0] sm:$0xff]
  %v267 = vld [vmem:[#allocation2 + $0xc8] sm:$0xff]
  %v268 = vld [vmem:[#allocation2 + $0xd0] sm:$0xff]
  %v269 = vld [vmem:[#allocation2 + $0xd8] sm:$0xff]
  %v270 = vld [vmem:[#allocation2 + $0xe0] sm:$0xff]
  %v271 = vld [vmem:[#allocation2 + $0xe8] sm:$0xff]
  %v272 = vld [vmem:[#allocation2 + $0xf0] sm:$0xff]
  %v273 = vld [vmem:[#allocation2 + $0xf8] sm:$0xff]
  %v274 = vld [vmem:[#allocation2 + $0x100] sm:$0xff]
  %v275 = vld [vmem:[#allocation2 + $0x108] sm:$0xff]
  %v276 = vld [vmem:[#allocation2 + $0x110] sm:$0xff]
  %v277 = vld [vmem:[#allocation2 + $0x118] sm:$0xff]
  %vm278 = vcmask 588800
  %v280 = vsel %vm278, %v241, 0
  %282 = vmatpush.msra.mxu0 0.0
  %283 = vmatpush.msra.mxu0 0.0
  %284 = vmatpush.msra.mxu0 0.0
  %285 = vmatpush.msra.mxu0 0.0
  %286 = vmatpush.msra.mxu0 0.0
  %287 = vmatpush.msra.mxu0 0.0
  %288 = vmatpush.msra.mxu0 0.0
  %289 = vmatpush.msra.mxu0 %v274
  %290 = vmatpush.msra.mxu0 %v270
  %291 = vmatpush.msra.mxu0 %v266
  %292 = vmatpush.msra.mxu0 %v262
  %293 = vmatpush.msra.mxu0 %v258
  %294 = vmatpush.msra.mxu0 %v254
  %295 = vmatpush.msra.mxu0 %v250
  %296 = vmatpush.msra.mxu0 %v246
  %297 = vmatpush.msra.mxu0 %v242
  %298 = vmatmul.f32.gmra.mxu0 %v280
  %v299 = vpop.f32.mrf.mxu0
  %v300 = vadd.f32 0.0, %v299
  %301 = vdwg.mxu0
  %302 = vmatpush.msra.mxu0 0.0
  %303 = vmatpush.msra.mxu0 0.0
  %304 = vmatpush.msra.mxu0 0.0
  %305 = vmatpush.msra.mxu0 0.0
  %306 = vmatpush.msra.mxu0 0.0
  %307 = vmatpush.msra.mxu0 0.0
  %308 = vmatpush.msra.mxu0 0.0
  %309 = vmatpush.msra.mxu0 %v275
  %310 = vmatpush.msra.mxu0 %v271
  %311 = vmatpush.msra.mxu0 %v267
  %312 = vmatpush.msra.mxu0 %v263
  %313 = vmatpush.msra.mxu0 %v259
  %314 = vmatpush.msra.mxu0 %v255
  %315 = vmatpush.msra.mxu0 %v251
  %316 = vmatpush.msra.mxu0 %v247
  %317 = vmatpush.msra.mxu0 %v243
  %318 = vmatmul.f32.gmra.mxu0 %v280
  %v319 = vpop.f32.mrf.mxu0
  %v320 = vadd.f32 0.0, %v319
  %321 = vdwg.mxu0
  %322 = vmatpush.msra.mxu0 0.0
  %323 = vmatpush.msra.mxu0 0.0
  %324 = vmatpush.msra.mxu0 0.0
  %325 = vmatpush.msra.mxu0 0.0
  %326 = vmatpush.msra.mxu0 0.0
  %327 = vmatpush.msra.mxu0 0.0
  %328 = vmatpush.msra.mxu0 0.0
  %329 = vmatpush.msra.mxu0 %v276
  %330 = vmatpush.msra.mxu0 %v272
  %331 = vmatpush.msra.mxu0 %v268
  %332 = vmatpush.msra.mxu0 %v264
  %333 = vmatpush.msra.mxu0 %v260
  %334 = vmatpush.msra.mxu0 %v256
  %335 = vmatpush.msra.mxu0 %v252
  %336 = vmatpush.msra.mxu0 %v248
  %337 = vmatpush.msra.mxu0 %v244
  %338 = vmatmul.f32.gmra.mxu0 %v280
  %v339 = vpop.f32.mrf.mxu0
  %v340 = vadd.f32 0.0, %v339
  %341 = vdwg.mxu0
  %342 = vmatpush.msra.mxu0 0.0
  %343 = vmatpush.msra.mxu0 0.0
  %344 = vmatpush.msra.mxu0 0.0
  %345 = vmatpush.msra.mxu0 0.0
  %346 = vmatpush.msra.mxu0 0.0
  %347 = vmatpush.msra.mxu0 0.0
  %348 = vmatpush.msra.mxu0 0.0
  %349 = vmatpush.msra.mxu0 %v277
  %350 = vmatpush.msra.mxu0 %v273
  %351 = vmatpush.msra.mxu0 %v269
  %352 = vmatpush.msra.mxu0 %v265
  %353 = vmatpush.msra.mxu0 %v261
  %354 = vmatpush.msra.mxu0 %v257
  %355 = vmatpush.msra.mxu0 %v253
  %356 = vmatpush.msra.mxu0 %v249
  %357 = vmatpush.msra.mxu0 %v245
  %358 = vmatmul.f32.gmra.mxu0 %v280
  %v359 = vpop.f32.mrf.mxu0
  %v360 = vadd.f32 0.0, %v359
  %361 = vdwg.mxu0
  %v362 = vadd.f32 %v31, %v300
  %v363 = vadd.f32 %v32, %v320
  %v364 = vadd.f32 %v33, %v340
  %v365 = vadd.f32 %v34, %v360
  %v366 = vmax.f32 %v362, 0.0
  %v367 = vmax.f32 %v363, 0.0
  %v368 = vmax.f32 %v364, 0.0
  %v369 = vmax.f32 %v365, 0.0
  %v370 = vld [vmem:[%s5] sm:$0xff]
  %v371 = vld [vmem:[%s5 + $0x8] sm:$0xff]
  %v372 = vld [vmem:[%s5 + $0x10] sm:$0xff]
  %v373 = vld [vmem:[%s5 + $0x18] sm:$0xff]
  %374 = vrot.lane.b32.xlu0 %v366, 17
  %v375 = vpop.permute.xlu0 %374
  %376 = vrot.lane.b32.xlu0 %v367, 17
  %v377 = vpop.permute.xlu0 %376
  %378 = vrot.lane.b32.xlu0 %v368, 17
  %v379 = vpop.permute.xlu0 %378
  %380 = vrot.lane.b32.xlu0 %v369, 17
  %v381 = vpop.permute.xlu0 %380
  %v382 = vsel %vm45, %v379, %v381
  %v383 = vsel %vm45, %v377, %v379
  %v384 = vsel %vm45, %v375, %v377
  %v385 = vsel %vm45, %v381, %v375
  %v386 = vld [vmem:[%s1] sm:$0xff]
  %v387 = vld [vmem:[%s1 + $0x8] sm:$0xff]
  %v388 = vld [vmem:[%s1 + $0x10] sm:$0xff]
  %v389 = vld [vmem:[%s1 + $0x18] sm:$0xff]
  %v390 = vmul.f32 %v385, %v386
  %v391 = vmul.f32 %v384, %v387
  %v392 = vmul.f32 %v383, %v388
  %v393 = vmul.f32 %v382, %v389
  %394 = vst [vmem:[#allocation2] sm:$0xff] %v390
  %395 = vst [vmem:[#allocation2 + $0x8] sm:$0xff] %v391
  %396 = vst [vmem:[#allocation2 + $0x10] sm:$0xff] %v392
  %397 = vst [vmem:[#allocation2 + $0x18] sm:$0xff] %v393
  %398 = vrot.lane.b32.xlu0 %v366, 16
  %v399 = vpop.permute.xlu0 %398
  %400 = vrot.lane.b32.xlu0 %v367, 16
  %v401 = vpop.permute.xlu0 %400
  %402 = vrot.lane.b32.xlu0 %v368, 16
  %v403 = vpop.permute.xlu0 %402
  %404 = vrot.lane.b32.xlu0 %v369, 16
  %v405 = vpop.permute.xlu0 %404
  %v406 = vsel %vm70, %v403, %v405
  %v407 = vsel %vm70, %v401, %v403
  %v408 = vsel %vm70, %v399, %v401
  %v409 = vsel %vm70, %v405, %v399
  %v410 = vld [vmem:[%s1 + $0x20] sm:$0xff]
  %v411 = vld [vmem:[%s1 + $0x28] sm:$0xff]
  %v412 = vld [vmem:[%s1 + $0x30] sm:$0xff]
  %v413 = vld [vmem:[%s1 + $0x38] sm:$0xff]
  %v414 = vmul.f32 %v409, %v410
  %v415 = vmul.f32 %v408, %v411
  %v416 = vmul.f32 %v407, %v412
  %v417 = vmul.f32 %v406, %v413
  %418 = vst [vmem:[#allocation2 + $0x20] sm:$0xff] %v414
  %419 = vst [vmem:[#allocation2 + $0x28] sm:$0xff] %v415
  %420 = vst [vmem:[#allocation2 + $0x30] sm:$0xff] %v416
  %421 = vst [vmem:[#allocation2 + $0x38] sm:$0xff] %v417
  %422 = vrot.lane.b32.xlu0 %v366, 15
  %v423 = vpop.permute.xlu0 %422
  %424 = vrot.lane.b32.xlu0 %v367, 15
  %v425 = vpop.permute.xlu0 %424
  %426 = vrot.lane.b32.xlu0 %v368, 15
  %v427 = vpop.permute.xlu0 %426
  %428 = vrot.lane.b32.xlu0 %v369, 15
  %v429 = vpop.permute.xlu0 %428
  %v430 = vsel %vm95, %v427, %v429
  %v431 = vsel %vm95, %v425, %v427
  %v432 = vsel %vm95, %v423, %v425
  %v433 = vsel %vm95, %v429, %v423
  %v434 = vld [vmem:[%s1 + $0x40] sm:$0xff]
  %v435 = vld [vmem:[%s1 + $0x48] sm:$0xff]
  %v436 = vld [vmem:[%s1 + $0x50] sm:$0xff]
  %v437 = vld [vmem:[%s1 + $0x58] sm:$0xff]
  %v438 = vmul.f32 %v433, %v434
  %v439 = vmul.f32 %v432, %v435
  %v440 = vmul.f32 %v431, %v436
  %v441 = vmul.f32 %v430, %v437
  %442 = vst [vmem:[#allocation2 + $0x40] sm:$0xff] %v438
  %443 = vst [vmem:[#allocation2 + $0x48] sm:$0xff] %v439
  %444 = vst [vmem:[#allocation2 + $0x50] sm:$0xff] %v440
  %445 = vst [vmem:[#allocation2 + $0x58] sm:$0xff] %v441
  %446 = vrot.lane.b32.xlu0 %v366, 1
  %v447 = vpop.permute.xlu0 %446
  %448 = vrot.lane.b32.xlu0 %v367, 1
  %v449 = vpop.permute.xlu0 %448
  %450 = vrot.lane.b32.xlu0 %v368, 1
  %v451 = vpop.permute.xlu0 %450
  %452 = vrot.lane.b32.xlu0 %v369, 1
  %v453 = vpop.permute.xlu0 %452
  %v454 = vsel %vm120, %v451, %v453
  %v455 = vsel %vm120, %v449, %v451
  %v456 = vsel %vm120, %v447, %v449
  %v457 = vsel %vm120, %v453, %v447
  %v458 = vld [vmem:[%s1 + $0x60] sm:$0xff]
  %v459 = vld [vmem:[%s1 + $0x68] sm:$0xff]
  %v460 = vld [vmem:[%s1 + $0x70] sm:$0xff]
  %v461 = vld [vmem:[%s1 + $0x78] sm:$0xff]
  %v462 = vmul.f32 %v457, %v458
  %v463 = vmul.f32 %v456, %v459
  %v464 = vmul.f32 %v455, %v460
  %v465 = vmul.f32 %v454, %v461
  %466 = vst [vmem:[#allocation2 + $0x60] sm:$0xff] %v462
  %467 = vst [vmem:[#allocation2 + $0x68] sm:$0xff] %v463
  %468 = vst [vmem:[#allocation2 + $0x70] sm:$0xff] %v464
  %469 = vst [vmem:[#allocation2 + $0x78] sm:$0xff] %v465
  %470 = vst [vmem:[#allocation2 + $0x80] sm:$0xff] %v366
  %471 = vst [vmem:[#allocation2 + $0x88] sm:$0xff] %v367
  %472 = vst [vmem:[#allocation2 + $0x90] sm:$0xff] %v368
  %473 = vst [vmem:[#allocation2 + $0x98] sm:$0xff] %v369
  %474 = vrot.lane.b32.xlu0 %v366, 127
  %v475 = vpop.permute.xlu0 %474
  %476 = vrot.lane.b32.xlu0 %v367, 127
  %v477 = vpop.permute.xlu0 %476
  %478 = vrot.lane.b32.xlu0 %v368, 127
  %v479 = vpop.permute.xlu0 %478
  %480 = vrot.lane.b32.xlu0 %v369, 127
  %v481 = vpop.permute.xlu0 %480
  %v482 = vsel %vm149, %v479, %v481
  %v483 = vsel %vm149, %v477, %v479
  %v484 = vsel %vm149, %v475, %v477
  %v485 = vsel %vm149, %v481, %v475
  %v486 = vld [vmem:[%s1 + $0xa0] sm:$0xff]
  %v487 = vld [vmem:[%s1 + $0xa8] sm:$0xff]
  %v488 = vld [vmem:[%s1 + $0xb0] sm:$0xff]
  %v489 = vld [vmem:[%s1 + $0xb8] sm:$0xff]
  %v490 = vmul.f32 %v484, %v486
  %v491 = vmul.f32 %v483, %v487
  %v492 = vmul.f32 %v482, %v488
  %v493 = vmul.f32 %v485, %v489
  %494 = vst [vmem:[#allocation2 + $0xa0] sm:$0xff] %v490
  %495 = vst [vmem:[#allocation2 + $0xa8] sm:$0xff] %v491
  %496 = vst [vmem:[#allocation2 + $0xb0] sm:$0xff] %v492
  %497 = vst [vmem:[#allocation2 + $0xb8] sm:$0xff] %v493
  %498 = vrot.lane.b32.xlu0 %v366, 113
  %v499 = vpop.permute.xlu0 %498
  %500 = vrot.lane.b32.xlu0 %v367, 113
  %v501 = vpop.permute.xlu0 %500
  %502 = vrot.lane.b32.xlu0 %v368, 113
  %v503 = vpop.permute.xlu0 %502
  %504 = vrot.lane.b32.xlu0 %v369, 113
  %v505 = vpop.permute.xlu0 %504
  %v506 = vsel %vm174, %v503, %v505
  %v507 = vsel %vm174, %v501, %v503
  %v508 = vsel %vm174, %v499, %v501
  %v509 = vsel %vm174, %v505, %v499
  %v510 = vld [vmem:[%s1 + $0xc0] sm:$0xff]
  %v511 = vld [vmem:[%s1 + $0xc8] sm:$0xff]
  %v512 = vld [vmem:[%s1 + $0xd0] sm:$0xff]
  %v513 = vld [vmem:[%s1 + $0xd8] sm:$0xff]
  %v514 = vmul.f32 %v508, %v510
  %v515 = vmul.f32 %v507, %v511
  %v516 = vmul.f32 %v506, %v512
  %v517 = vmul.f32 %v509, %v513
  %518 = vst [vmem:[#allocation2 + $0xc0] sm:$0xff] %v514
  %519 = vst [vmem:[#allocation2 + $0xc8] sm:$0xff] %v515
  %520 = vst [vmem:[#allocation2 + $0xd0] sm:$0xff] %v516
  %521 = vst [vmem:[#allocation2 + $0xd8] sm:$0xff] %v517
  %522 = vrot.lane.b32.xlu0 %v366, 112
  %v523 = vpop.permute.xlu0 %522
  %524 = vrot.lane.b32.xlu0 %v367, 112
  %v525 = vpop.permute.xlu0 %524
  %526 = vrot.lane.b32.xlu0 %v368, 112
  %v527 = vpop.permute.xlu0 %526
  %528 = vrot.lane.b32.xlu0 %v369, 112
  %v529 = vpop.permute.xlu0 %528
  %v530 = vsel %vm199, %v527, %v529
  %v531 = vsel %vm199, %v525, %v527
  %v532 = vsel %vm199, %v523, %v525
  %v533 = vsel %vm199, %v529, %v523
  %v534 = vld [vmem:[%s1 + $0xe0] sm:$0xff]
  %v535 = vld [vmem:[%s1 + $0xe8] sm:$0xff]
  %v536 = vld [vmem:[%s1 + $0xf0] sm:$0xff]
  %v537 = vld [vmem:[%s1 + $0xf8] sm:$0xff]
  %v538 = vmul.f32 %v532, %v534
  %v539 = vmul.f32 %v531, %v535
  %v540 = vmul.f32 %v530, %v536
  %v541 = vmul.f32 %v533, %v537
  %542 = vst [vmem:[#allocation2 + $0xe0] sm:$0xff] %v538
  %543 = vst [vmem:[#allocation2 + $0xe8] sm:$0xff] %v539
  %544 = vst [vmem:[#allocation2 + $0xf0] sm:$0xff] %v540
  %545 = vst [vmem:[#allocation2 + $0xf8] sm:$0xff] %v541
  %546 = vrot.lane.b32.xlu0 %v366, 111
  %v547 = vpop.permute.xlu0 %546
  %548 = vrot.lane.b32.xlu0 %v367, 111
  %v549 = vpop.permute.xlu0 %548
  %550 = vrot.lane.b32.xlu0 %v368, 111
  %v551 = vpop.permute.xlu0 %550
  %552 = vrot.lane.b32.xlu0 %v369, 111
  %v553 = vpop.permute.xlu0 %552
  %v554 = vsel %vm224, %v551, %v553
  %v555 = vsel %vm224, %v549, %v551
  %v556 = vsel %vm224, %v547, %v549
  %v557 = vsel %vm224, %v553, %v547
  %v558 = vld [vmem:[%s1 + $0x100] sm:$0xff]
  %v559 = vld [vmem:[%s1 + $0x108] sm:$0xff]
  %v560 = vld [vmem:[%s1 + $0x110] sm:$0xff]
  %v561 = vld [vmem:[%s1 + $0x118] sm:$0xff]
  %v562 = vmul.f32 %v556, %v558
  %v563 = vmul.f32 %v555, %v559
  %v564 = vmul.f32 %v554, %v560
  %v565 = vmul.f32 %v557, %v561
  %566 = vst [vmem:[#allocation2 + $0x100] sm:$0xff] %v562
  %567 = vst [vmem:[#allocation2 + $0x108] sm:$0xff] %v563
  %568 = vst [vmem:[#allocation2 + $0x110] sm:$0xff] %v564
  %569 = vst [vmem:[#allocation2 + $0x118] sm:$0xff] %v565
  %v570 = vld [vmem:[%s4] sm:$0xff]
  %v571 = vld [vmem:[#allocation2] sm:$0xff]
  %v572 = vld [vmem:[#allocation2 + $0x8] sm:$0xff]
  %v573 = vld [vmem:[#allocation2 + $0x10] sm:$0xff]
  %v574 = vld [vmem:[#allocation2 + $0x18] sm:$0xff]
  %v575 = vld [vmem:[#allocation2 + $0x20] sm:$0xff]
  %v576 = vld [vmem:[#allocation2 + $0x28] sm:$0xff]
  %v577 = vld [vmem:[#allocation2 + $0x30] sm:$0xff]
  %v578 = vld [vmem:[#allocation2 + $0x38] sm:$0xff]
  %v579 = vld [vmem:[#allocation2 + $0x40] sm:$0xff]
  %v580 = vld [vmem:[#allocation2 + $0x48] sm:$0xff]
  %v581 = vld [vmem:[#allocation2 + $0x50] sm:$0xff]
  %v582 = vld [vmem:[#allocation2 + $0x58] sm:$0xff]
  %v583 = vld [vmem:[#allocation2 + $0x60] sm:$0xff]
  %v584 = vld [vmem:[#allocation2 + $0x68] sm:$0xff]
  %v585 = vld [vmem:[#allocation2 + $0x70] sm:$0xff]
  %v586 = vld [vmem:[#allocation2 + $0x78] sm:$0xff]
  %v587 = vld [vmem:[#allocation2 + $0x80] sm:$0xff]
  %v588 = vld [vmem:[#allocation2 + $0x88] sm:$0xff]
  %v589 = vld [vmem:[#allocation2 + $0x90] sm:$0xff]
  %v590 = vld [vmem:[#allocation2 + $0x98] sm:$0xff]
  %v591 = vld [vmem:[#allocation2 + $0xa0] sm:$0xff]
  %v592 = vld [vmem:[#allocation2 + $0xa8] sm:$0xff]
  %v593 = vld [vmem:[#allocation2 + $0xb0] sm:$0xff]
  %v594 = vld [vmem:[#allocation2 + $0xb8] sm:$0xff]
  %v595 = vld [vmem:[#allocation2 + $0xc0] sm:$0xff]
  %v596 = vld [vmem:[#allocation2 + $0xc8] sm:$0xff]
  %v597 = vld [vmem:[#allocation2 + $0xd0] sm:$0xff]
  %v598 = vld [vmem:[#allocation2 + $0xd8] sm:$0xff]
  %v599 = vld [vmem:[#allocation2 + $0xe0] sm:$0xff]
  %v600 = vld [vmem:[#allocation2 + $0xe8] sm:$0xff]
  %v601 = vld [vmem:[#allocation2 + $0xf0] sm:$0xff]
  %v602 = vld [vmem:[#allocation2 + $0xf8] sm:$0xff]
  %v603 = vld [vmem:[#allocation2 + $0x100] sm:$0xff]
  %v604 = vld [vmem:[#allocation2 + $0x108] sm:$0xff]
  %v605 = vld [vmem:[#allocation2 + $0x110] sm:$0xff]
  %v606 = vld [vmem:[#allocation2 + $0x118] sm:$0xff]
  %v608 = vsel %vm278, %v570, 0
  %610 = vmatpush.msra.mxu0 0.0
  %611 = vmatpush.msra.mxu0 0.0
  %612 = vmatpush.msra.mxu0 0.0
  %613 = vmatpush.msra.mxu0 0.0
  %614 = vmatpush.msra.mxu0 0.0
  %615 = vmatpush.msra.mxu0 0.0
  %616 = vmatpush.msra.mxu0 0.0
  %617 = vmatpush.msra.mxu0 %v603
  %618 = vmatpush.msra.mxu0 %v599
  %619 = vmatpush.msra.mxu0 %v595
  %620 = vmatpush.msra.mxu0 %v591
  %621 = vmatpush.msra.mxu0 %v587
  %622 = vmatpush.msra.mxu0 %v583
  %623 = vmatpush.msra.mxu0 %v579
  %624 = vmatpush.msra.mxu0 %v575
  %625 = vmatpush.msra.mxu0 %v571
  %626 = vmatmul.f32.gmra.mxu0 %v608
  %v627 = vpop.f32.mrf.mxu0
  %v628 = vadd.f32 0.0, %v627
  %629 = vdwg.mxu0
  %630 = vmatpush.msra.mxu0 0.0
  %631 = vmatpush.msra.mxu0 0.0
  %632 = vmatpush.msra.mxu0 0.0
  %633 = vmatpush.msra.mxu0 0.0
  %634 = vmatpush.msra.mxu0 0.0
  %635 = vmatpush.msra.mxu0 0.0
  %636 = vmatpush.msra.mxu0 0.0
  %637 = vmatpush.msra.mxu0 %v604
  %638 = vmatpush.msra.mxu0 %v600
  %639 = vmatpush.msra.mxu0 %v596
  %640 = vmatpush.msra.mxu0 %v592
  %641 = vmatpush.msra.mxu0 %v588
  %642 = vmatpush.msra.mxu0 %v584
  %643 = vmatpush.msra.mxu0 %v580
  %644 = vmatpush.msra.mxu0 %v576
  %645 = vmatpush.msra.mxu0 %v572
  %646 = vmatmul.f32.gmra.mxu0 %v608
  %v647 = vpop.f32.mrf.mxu0
  %v648 = vadd.f32 0.0, %v647
  %649 = vdwg.mxu0
  %650 = vmatpush.msra.mxu0 0.0
  %651 = vmatpush.msra.mxu0 0.0
  %652 = vmatpush.msra.mxu0 0.0
  %653 = vmatpush.msra.mxu0 0.0
  %654 = vmatpush.msra.mxu0 0.0
  %655 = vmatpush.msra.mxu0 0.0
  %656 = vmatpush.msra.mxu0 0.0
  %657 = vmatpush.msra.mxu0 %v605
  %658 = vmatpush.msra.mxu0 %v601
  %659 = vmatpush.msra.mxu0 %v597
  %660 = vmatpush.msra.mxu0 %v593
  %661 = vmatpush.msra.mxu0 %v589
  %662 = vmatpush.msra.mxu0 %v585
  %663 = vmatpush.msra.mxu0 %v581
  %664 = vmatpush.msra.mxu0 %v577
  %665 = vmatpush.msra.mxu0 %v573
  %666 = vmatmul.f32.gmra.mxu0 %v608
  %v667 = vpop.f32.mrf.mxu0
  %v668 = vadd.f32 0.0, %v667
  %669 = vdwg.mxu0
  %670 = vmatpush.msra.mxu0 0.0
  %671 = vmatpush.msra.mxu0 0.0
  %672 = vmatpush.msra.mxu0 0.0
  %673 = vmatpush.msra.mxu0 0.0
  %674 = vmatpush.msra.mxu0 0.0
  %675 = vmatpush.msra.mxu0 0.0
  %676 = vmatpush.msra.mxu0 0.0
  %677 = vmatpush.msra.mxu0 %v606
  %678 = vmatpush.msra.mxu0 %v602
  %679 = vmatpush.msra.mxu0 %v598
  %680 = vmatpush.msra.mxu0 %v594
  %681 = vmatpush.msra.mxu0 %v590
  %682 = vmatpush.msra.mxu0 %v586
  %683 = vmatpush.msra.mxu0 %v582
  %684 = vmatpush.msra.mxu0 %v578
  %685 = vmatpush.msra.mxu0 %v574
  %686 = vmatmul.f32.gmra.mxu0 %v608
  %v687 = vpop.f32.mrf.mxu0
  %v688 = vadd.f32 0.0, %v687
  %689 = vdwg.mxu0
  %v690 = vadd.f32 %v370, %v628
  %v691 = vadd.f32 %v371, %v648
  %v692 = vadd.f32 %v372, %v668
  %v693 = vadd.f32 %v373, %v688
  %694 = vst [vmem:[%s6] sm:$0xff] %v690
  %695 = vst [vmem:[%s6 + $0x8] sm:$0xff] %v691
  %696 = vst [vmem:[%s6 + $0x10] sm:$0xff] %v692
  %697 = vst [vmem:[%s6 + $0x18] sm:$0xff] %v693
  // Predicated region
  $region26: #{forward.1} parent=0 // pred_check
    _
  $region27: #{forward.1} parent=0 // pred_check_branch
    %699 = sbr.rel (0) target = $region29
  $region28: #{forward.1} parent=0 // pred_region
    _
  $region29: #{forward.1} parent=0 // pred_fallthru
    _
  // Predicated region
  $region30: #{forward.1} parent=0 // pred_check
    _
  $region31: #{forward.1} parent=0 // pred_check_branch
    %701 = sbr.rel (0) target = $region33
  $region32: #{forward.1} parent=0 // pred_region
    _
  $region33: #{forward.1} parent=0 // pred_fallthru
    _

</llo_original>
